<compile_context>
chip_gen: v5e
topology: v5e:2x2
jax: 0.10.0
libtpu: 0.0.40
codegen_flags: <defaults>
</compile_context>

<pallas_src>
import functools

import jax
import jax.numpy as jnp
from jax.experimental import pallas as pl
from jax.experimental.pallas import tpu as pltpu


def _asp_kernel(x_ref, s_ref, st_ref, w1x_ref, w1m_ref, w1s_ref, b1_ref,
                w2_ref, b2_ref, w3_ref, b3_ref, o_ref, *, mm_dtype):
    """One grid step = Bblk batch elements laid out as one (C, L=Bblk*T) tile."""
    x = x_ref[0]                              # (C, L)    f32, lanes = Bblk*T
    seg_sum = s_ref[...]                      # (L, Bblk) 0/1 segment-sum matrix
    seg_bcast = st_ref[...]                   # (Bblk, L) = seg_sum.T (segment broadcast)
    C, L = x.shape
    bblk = seg_sum.shape[1]
    T = L // bblk

    f32 = jnp.float32

    def mxu(a, b):                            # "conv" matmuls (bf16-castable on v6e/v7x)
        return jnp.dot(a.astype(mm_dtype), b.astype(mm_dtype),
                       preferred_element_type=f32)

    def segdot(a, b):                         # segment reductions / broadcasts, keep f32
        return jnp.dot(a, b, preferred_element_type=f32)

    # ---- global (unweighted) per-batch stats: single pass over x ----------
    xsq = x * x
    s1 = segdot(x, seg_sum)                   # (C, Bblk)  sum_t x
    s2 = segdot(xsq, seg_sum)                 # (C, Bblk)  sum_t x^2
    mean = s1 * (1.0 / T)
    var = (s2 - s1 * mean) * (1.0 / (T - 1))  # unbiased, matches torch.std default
    std = jnp.maximum(jnp.sqrt(jnp.maximum(var, 0.0)), 1e-5)

    # ---- tdnn 1x1 conv + ReLU, with the context concat split away ---------
    #   W1 @ [x; mean; std] + b1  ==  W1x @ x  +  (W1m @ mean + W1s @ std + b1)
    hbias = mxu(w1m_ref[...], mean) + mxu(w1s_ref[...], std) + b1_ref[...]   # (H, Bblk)
    h = mxu(w1x_ref[...], x) + segdot(hbias, seg_bcast)                      # (H, L)
    h = jnp.maximum(h, 0.0)

    # ---- attention: 1x1 conv -> tanh -> 1x1 conv -> softmax over T --------
    a = jnp.tanh(mxu(w2_ref[...], h) + b2_ref[...])                          # (H, L)
    logits = mxu(w3_ref[...], a) + b3_ref[...]                               # (C, L)

    # Softmax over each batch's T lanes with deferred normalization.
    m = jnp.max(logits, axis=1, keepdims=True)                               # (C, 1) XLU
    e = jnp.exp(logits - m)                                                  # (C, L) EUP
    z = segdot(e, seg_sum)                                                   # (C, Bblk)

    # ---- weighted statistics (normalize once by 1/Z at the end) -----------
    xe = x * e
    num_mean = segdot(xe, seg_sum)                                           # (C, Bblk)
    num_sq = segdot(xsq * e, seg_sum)                                        # (C, Bblk)

    inv_z = pl.reciprocal(z, approx=True)                                    # EUP slot
    wmean = num_mean * inv_z
    wvar = num_sq * inv_z - wmean * wmean
    wstd = jnp.sqrt(jnp.maximum(wvar, 1e-5))

    out = jnp.concatenate([wmean, wstd], axis=0)                             # (2C, Bblk)
    o_ref[0] = out.T                                                         # (Bblk, 2C) lane-dense store


def _pick_bblk(batch, t, lane_target=128):
    """Smallest divisor of `batch` whose block fills >= lane_target lanes;
    falls back to the whole batch if no divisor reaches the target."""
    for d in range(1, batch + 1):
        if batch % d == 0 and d * t >= lane_target:
            return d
    return batch


def attentive_stats_pool(x, w1, b1, w2, b2, w3, b3, *, matmul_dtype=jnp.float32):
    """x: (B, C, T) float32 -> (B, 2C) float32.

    matmul_dtype: pass jnp.bfloat16 on v6e/v7x at production ECAPA sizes for
    MXU peak; keep float32 for bit-accurate comparison at small sizes.
    """
    B, C, T = x.shape
    H = w1.shape[0]
    assert w1.shape == (H, 3 * C)
    assert T >= 2, "unbiased std (torch.std default) requires T >= 2"

    bblk = _pick_bblk(B, T)
    nblk = B // bblk
    L = bblk * T

    # TODO(synk): for very long T at production sizes on v7x (64 MiB VMEM),
    # tile T with an "arbitrary" grid axis + online mean/M2 and online-softmax
    # accumulators instead of keeping the full (C, Bblk*T) tile resident.

    # lane-dense re-layout (wrapper-side plumbing): (B, C, T) -> (nblk, C, Bblk*T)
    x3 = x.reshape(nblk, bblk, C, T).transpose(0, 2, 1, 3).reshape(nblk, C, L)

    # split the 1x1 "context" conv: W1 @ [x; mean; std] = W1x@x + W1m@mean + W1s@std
    w1x = w1[:, :C]
    w1m = w1[:, C:2 * C]
    w1s = w1[:, 2 * C:]

    # biases as (out, 1) columns so they broadcast over lanes inside the kernel
    b1c = b1.reshape(H, 1)
    b2c = b2.reshape(H, 1)
    b3c = b3.reshape(C, 1)

    # constant segment matrices: S[k, j] = 1 iff lane k belongs to batch j of the block
    seg = jnp.arange(L) // T
    s_mat = (seg[:, None] == jnp.arange(bblk)[None, :]).astype(jnp.float32)   # (L, Bblk)
    st_mat = s_mat.T                                                          # (Bblk, L)

    full = lambda i: (0, 0)
    kernel = functools.partial(_asp_kernel, mm_dtype=matmul_dtype)

    out = pl.pallas_call(
        kernel,
        out_shape=jax.ShapeDtypeStruct((nblk, bblk, 2 * C), jnp.float32),
        grid_spec=pltpu.PrefetchScalarGridSpec(
            num_scalar_prefetch=0,
            grid=(nblk,),
            in_specs=[
                pl.BlockSpec((1, C, L), lambda i: (i, 0, 0)),   # x block (C, Bblk*T)
                pl.BlockSpec((L, bblk), full),                  # segment-sum matrix
                pl.BlockSpec((bblk, L), full),                  # segment-broadcast matrix
                pl.BlockSpec((H, C), full),                     # W1[:, :C]
                pl.BlockSpec((H, C), full),                     # W1[:, C:2C]
                pl.BlockSpec((H, C), full),                     # W1[:, 2C:]
                pl.BlockSpec((H, 1), full),                     # b1
                pl.BlockSpec((H, H), full),                     # attn conv1 weight
                pl.BlockSpec((H, 1), full),                     # attn conv1 bias
                pl.BlockSpec((C, H), full),                     # attn conv2 weight
                pl.BlockSpec((C, 1), full),                     # attn conv2 bias
            ],
            out_specs=pl.BlockSpec((1, bblk, 2 * C), lambda i: (i, 0, 0)),
        ),
        compiler_params=pltpu.CompilerParams(
            dimension_semantics=("parallel",)),
    )(x3, s_mat, st_mat, w1x, w1m, w1s, b1c, w2, b2c, w3, b3c)
    return out.reshape(B, 2 * C)


def _reference(x, w1, b1, w2, b2, w3, b3):
    """Plain-JAX reference mirroring the PyTorch forward."""
    mean = jnp.mean(x, axis=2, keepdims=True)
    std = jnp.clip(jnp.std(x, axis=2, keepdims=True, ddof=1), 1e-5, None)
    context = jnp.concatenate(
        [x, jnp.broadcast_to(mean, x.shape), jnp.broadcast_to(std, x.shape)], axis=1)
    h = jax.nn.relu(jnp.einsum("oc,bct->bot", w1, context) + b1[None, :, None])
    a = jnp.tanh(jnp.einsum("oc,bct->bot", w2, h) + b2[None, :, None])
    logits = jnp.einsum("oc,bct->bot", w3, a) + b3[None, :, None]
    attn = jax.nn.softmax(logits, axis=2)
    wmean = jnp.sum(x * attn, axis=2)
    wstd = jnp.sqrt(jnp.clip(jnp.sum(x * x * attn, axis=2) - wmean ** 2, 1e-5, None))
    return jnp.concatenate([wmean, wstd], axis=1)


if __name__ == "__main__":
    B, C, T, H = 2, 16, 32, 32   # in_channels=16, hidden_size=32, seq len 32

    key = jax.random.PRNGKey(0)
    kx, k1, k2, k3, k4, k5, k6 = jax.random.split(key, 7)

    x = jax.random.normal(kx, (B, C, T), dtype=jnp.float32)

    # Conv1d(in, out, kernel_size=1) weights -> (out, in); deterministic init.
    w1 = 0.1 * jax.random.normal(k1, (H, 3 * C), dtype=jnp.float32)
    b1 = 0.1 * jax.random.normal(k2, (H,), dtype=jnp.float32)
    w2 = 0.1 * jax.random.normal(k3, (H, H), dtype=jnp.float32)
    b2 = 0.1 * jax.random.normal(k4, (H,), dtype=jnp.float32)
    w3 = 0.1 * jax.random.normal(k5, (C, H), dtype=jnp.float32)
    b3 = 0.1 * jax.random.normal(k6, (C,), dtype=jnp.float32)

    out = attentive_stats_pool(x, w1, b1, w2, b2, w3, b3)
    out = jax.block_until_ready(out)

    ref = _reference(x, w1, b1, w2, b2, w3, b3)
    assert out.shape == (B, 2 * C)
    # approx reciprocal (EUP) + reassociated one-pass reductions -> compare at 1e-3.
    assert jnp.allclose(out, ref, rtol=1e-3, atol=1e-3), "mismatch vs reference"

    print("KERNEL_OK")
</pallas_src>

<mosaic_0001>
module attributes {stable_mosaic.version = 11 : i64} {
  func.func @_asp_kernel(%arg0: i32, %arg1: memref<1x16x64xf32, #tpu.memory_space<vmem>>, %arg2: memref<64x2xf32, #tpu.memory_space<vmem>>, %arg3: memref<2x64xf32, #tpu.memory_space<vmem>>, %arg4: memref<32x16xf32, #tpu.memory_space<vmem>>, %arg5: memref<32x16xf32, #tpu.memory_space<vmem>>, %arg6: memref<32x16xf32, #tpu.memory_space<vmem>>, %arg7: memref<32x1xf32, #tpu.memory_space<vmem>>, %arg8: memref<32x32xf32, #tpu.memory_space<vmem>>, %arg9: memref<32x1xf32, #tpu.memory_space<vmem>>, %arg10: memref<16x32xf32, #tpu.memory_space<vmem>>, %arg11: memref<16x1xf32, #tpu.memory_space<vmem>>, %arg12: memref<1x2x32xf32, #tpu.memory_space<vmem>>) attributes {dimension_semantics = [#tpu.dimension_semantics<parallel>], iteration_bounds = array<i64: 1>, scalar_prefetch = 0 : i64, scratch_operands = 0 : i64, tpu.core_type = #tpu.core_type<tc>, window_params = [{transform_indices = @transform_0, window_bounds = array<i64: 1, 16, 64>}, {pipeline_mode = #tpu.pipeline_mode<synchronous>, transform_indices = @transform_1, window_bounds = array<i64: 64, 2>}, {pipeline_mode = #tpu.pipeline_mode<synchronous>, transform_indices = @transform_2, window_bounds = array<i64: 2, 64>}, {pipeline_mode = #tpu.pipeline_mode<synchronous>, transform_indices = @transform_3, window_bounds = array<i64: 32, 16>}, {pipeline_mode = #tpu.pipeline_mode<synchronous>, transform_indices = @transform_4, window_bounds = array<i64: 32, 16>}, {pipeline_mode = #tpu.pipeline_mode<synchronous>, transform_indices = @transform_5, window_bounds = array<i64: 32, 16>}, {pipeline_mode = #tpu.pipeline_mode<synchronous>, transform_indices = @transform_6, window_bounds = array<i64: 32, 1>}, {pipeline_mode = #tpu.pipeline_mode<synchronous>, transform_indices = @transform_7, window_bounds = array<i64: 32, 32>}, {pipeline_mode = #tpu.pipeline_mode<synchronous>, transform_indices = @transform_8, window_bounds = array<i64: 32, 1>}, {pipeline_mode = #tpu.pipeline_mode<synchronous>, transform_indices = @transform_9, window_bounds = array<i64: 16, 32>}, {pipeline_mode = #tpu.pipeline_mode<synchronous>, transform_indices = @transform_10, window_bounds = array<i64: 16, 1>}, {transform_indices = @transform_11, window_bounds = array<i64: 1, 2, 32>}]} {
    %c0 = arith.constant 0 : index
    %c0_0 = arith.constant 0 : index
    %c0_1 = arith.constant 0 : index
    %0 = vector.load %arg1[%c0, %c0_0, %c0_1] : memref<1x16x64xf32, #tpu.memory_space<vmem>>, vector<1x16x64xf32>
    %1 = vector.shape_cast %0 : vector<1x16x64xf32> to vector<16x64xf32>
    %c0_2 = arith.constant 0 : index
    %c0_3 = arith.constant 0 : index
    %2 = vector.load %arg2[%c0_2, %c0_3] : memref<64x2xf32, #tpu.memory_space<vmem>>, vector<64x2xf32>
    %c0_4 = arith.constant 0 : index
    %c0_5 = arith.constant 0 : index
    %3 = vector.load %arg3[%c0_4, %c0_5] : memref<2x64xf32, #tpu.memory_space<vmem>>, vector<2x64xf32>
    %4 = arith.mulf %1, %1 : vector<16x64xf32>
    %cst = arith.constant dense<0.000000e+00> : vector<16x2xf32>
    %5 = tpu.matmul %1, %2, %cst {dimension_numbers = #tpu.dot_dimension_numbers<[1], [0], [0], [1], [0, 0, 1, 1], [], []>} : vector<16x64xf32>, vector<64x2xf32>, vector<16x2xf32> -> vector<16x2xf32>
    %cst_6 = arith.constant dense<0.000000e+00> : vector<16x2xf32>
    %6 = tpu.matmul %4, %2, %cst_6 {dimension_numbers = #tpu.dot_dimension_numbers<[1], [0], [0], [1], [0, 0, 1, 1], [], []>} : vector<16x64xf32>, vector<64x2xf32>, vector<16x2xf32> -> vector<16x2xf32>
    %cst_7 = arith.constant 3.125000e-02 : f32
    %7 = vector.broadcast %cst_7 : f32 to vector<16x2xf32>
    %8 = arith.mulf %5, %7 : vector<16x2xf32>
    %9 = arith.mulf %5, %8 : vector<16x2xf32>
    %10 = arith.subf %6, %9 : vector<16x2xf32>
    %cst_8 = arith.constant 0.0322580636 : f32
    %11 = vector.broadcast %cst_8 : f32 to vector<16x2xf32>
    %12 = arith.mulf %10, %11 : vector<16x2xf32>
    %cst_9 = arith.constant 0.000000e+00 : f32
    %13 = vector.broadcast %cst_9 : f32 to vector<16x2xf32>
    %14 = arith.maximumf %12, %13 : vector<16x2xf32>
    %15 = math.sqrt %14 : vector<16x2xf32>
    %cst_10 = arith.constant 9.99999974E-6 : f32
    %16 = vector.broadcast %cst_10 : f32 to vector<16x2xf32>
    %17 = arith.maximumf %15, %16 : vector<16x2xf32>
    %c0_11 = arith.constant 0 : index
    %c0_12 = arith.constant 0 : index
    %18 = vector.load %arg5[%c0_11, %c0_12] : memref<32x16xf32, #tpu.memory_space<vmem>>, vector<32x16xf32>
    %cst_13 = arith.constant dense<0.000000e+00> : vector<32x2xf32>
    %19 = tpu.matmul %18, %8, %cst_13 {dimension_numbers = #tpu.dot_dimension_numbers<[1], [0], [0], [1], [0, 0, 1, 1], [], []>} : vector<32x16xf32>, vector<16x2xf32>, vector<32x2xf32> -> vector<32x2xf32>
    %c0_14 = arith.constant 0 : index
    %c0_15 = arith.constant 0 : index
    %20 = vector.load %arg6[%c0_14, %c0_15] : memref<32x16xf32, #tpu.memory_space<vmem>>, vector<32x16xf32>
    %cst_16 = arith.constant dense<0.000000e+00> : vector<32x2xf32>
    %21 = tpu.matmul %20, %17, %cst_16 {dimension_numbers = #tpu.dot_dimension_numbers<[1], [0], [0], [1], [0, 0, 1, 1], [], []>} : vector<32x16xf32>, vector<16x2xf32>, vector<32x2xf32> -> vector<32x2xf32>
    %22 = arith.addf %19, %21 : vector<32x2xf32>
    %c0_17 = arith.constant 0 : index
    %c0_18 = arith.constant 0 : index
    %23 = vector.load %arg7[%c0_17, %c0_18] : memref<32x1xf32, #tpu.memory_space<vmem>>, vector<32x1xf32>
    %24 = vector.broadcast %23 : vector<32x1xf32> to vector<32x2xf32>
    %25 = arith.addf %22, %24 : vector<32x2xf32>
    %c0_19 = arith.constant 0 : index
    %c0_20 = arith.constant 0 : index
    %26 = vector.load %arg4[%c0_19, %c0_20] : memref<32x16xf32, #tpu.memory_space<vmem>>, vector<32x16xf32>
    %cst_21 = arith.constant dense<0.000000e+00> : vector<32x64xf32>
    %27 = tpu.matmul %26, %1, %cst_21 {dimension_numbers = #tpu.dot_dimension_numbers<[1], [0], [0], [1], [0, 0, 1, 1], [], []>} : vector<32x16xf32>, vector<16x64xf32>, vector<32x64xf32> -> vector<32x64xf32>
    %cst_22 = arith.constant dense<0.000000e+00> : vector<32x64xf32>
    %28 = tpu.matmul %25, %3, %cst_22 {dimension_numbers = #tpu.dot_dimension_numbers<[1], [0], [0], [1], [0, 0, 1, 1], [], []>} : vector<32x2xf32>, vector<2x64xf32>, vector<32x64xf32> -> vector<32x64xf32>
    %29 = arith.addf %27, %28 : vector<32x64xf32>
    %cst_23 = arith.constant 0.000000e+00 : f32
    %30 = vector.broadcast %cst_23 : f32 to vector<32x64xf32>
    %31 = arith.maximumf %29, %30 : vector<32x64xf32>
    %c0_24 = arith.constant 0 : index
    %c0_25 = arith.constant 0 : index
    %32 = vector.load %arg8[%c0_24, %c0_25] : memref<32x32xf32, #tpu.memory_space<vmem>>, vector<32x32xf32>
    %cst_26 = arith.constant dense<0.000000e+00> : vector<32x64xf32>
    %33 = tpu.matmul %32, %31, %cst_26 {dimension_numbers = #tpu.dot_dimension_numbers<[1], [0], [0], [1], [0, 0, 1, 1], [], []>} : vector<32x32xf32>, vector<32x64xf32>, vector<32x64xf32> -> vector<32x64xf32>
    %c0_27 = arith.constant 0 : index
    %c0_28 = arith.constant 0 : index
    %34 = vector.load %arg9[%c0_27, %c0_28] : memref<32x1xf32, #tpu.memory_space<vmem>>, vector<32x1xf32>
    %35 = vector.broadcast %34 : vector<32x1xf32> to vector<32x64xf32>
    %36 = arith.addf %33, %35 : vector<32x64xf32>
    %37 = math.tanh %36 : vector<32x64xf32>
    %c0_29 = arith.constant 0 : index
    %c0_30 = arith.constant 0 : index
    %38 = vector.load %arg10[%c0_29, %c0_30] : memref<16x32xf32, #tpu.memory_space<vmem>>, vector<16x32xf32>
    %cst_31 = arith.constant dense<0.000000e+00> : vector<16x64xf32>
    %39 = tpu.matmul %38, %37, %cst_31 {dimension_numbers = #tpu.dot_dimension_numbers<[1], [0], [0], [1], [0, 0, 1, 1], [], []>} : vector<16x32xf32>, vector<32x64xf32>, vector<16x64xf32> -> vector<16x64xf32>
    %c0_32 = arith.constant 0 : index
    %c0_33 = arith.constant 0 : index
    %40 = vector.load %arg11[%c0_32, %c0_33] : memref<16x1xf32, #tpu.memory_space<vmem>>, vector<16x1xf32>
    %41 = vector.broadcast %40 : vector<16x1xf32> to vector<16x64xf32>
    %42 = arith.addf %39, %41 : vector<16x64xf32>
    %cst_34 = arith.constant dense<0xFF800000> : vector<16xf32>
    %43 = vector.multi_reduction <maximumf>, %42, %cst_34 [1] : vector<16x64xf32> to vector<16xf32>
    %44 = vector.shape_cast %43 : vector<16xf32> to vector<16x1xf32>
    %45 = vector.broadcast %44 : vector<16x1xf32> to vector<16x64xf32>
    %46 = arith.subf %42, %45 : vector<16x64xf32>
    %47 = math.exp %46 : vector<16x64xf32>
    %cst_35 = arith.constant dense<0.000000e+00> : vector<16x2xf32>
    %48 = tpu.matmul %47, %2, %cst_35 {dimension_numbers = #tpu.dot_dimension_numbers<[1], [0], [0], [1], [0, 0, 1, 1], [], []>} : vector<16x64xf32>, vector<64x2xf32>, vector<16x2xf32> -> vector<16x2xf32>
    %49 = arith.mulf %1, %47 : vector<16x64xf32>
    %cst_36 = arith.constant dense<0.000000e+00> : vector<16x2xf32>
    %50 = tpu.matmul %49, %2, %cst_36 {dimension_numbers = #tpu.dot_dimension_numbers<[1], [0], [0], [1], [0, 0, 1, 1], [], []>} : vector<16x64xf32>, vector<64x2xf32>, vector<16x2xf32> -> vector<16x2xf32>
    %51 = arith.mulf %4, %47 : vector<16x64xf32>
    %cst_37 = arith.constant dense<0.000000e+00> : vector<16x2xf32>
    %52 = tpu.matmul %51, %2, %cst_37 {dimension_numbers = #tpu.dot_dimension_numbers<[1], [0], [0], [1], [0, 0, 1, 1], [], []>} : vector<16x64xf32>, vector<64x2xf32>, vector<16x2xf32> -> vector<16x2xf32>
    %53 = tpu.reciprocal %48 {approx = true} : vector<16x2xf32> -> vector<16x2xf32>
    %54 = arith.mulf %50, %53 : vector<16x2xf32>
    %55 = arith.mulf %52, %53 : vector<16x2xf32>
    %56 = arith.mulf %54, %54 : vector<16x2xf32>
    %57 = arith.subf %55, %56 : vector<16x2xf32>
    %cst_38 = arith.constant 9.99999974E-6 : f32
    %58 = vector.broadcast %cst_38 : f32 to vector<16x2xf32>
    %59 = arith.maximumf %57, %58 : vector<16x2xf32>
    %60 = math.sqrt %59 : vector<16x2xf32>
    %61 = tpu.concatenate %54, %60 in 0 : vector<16x2xf32>, vector<16x2xf32> -> vector<32x2xf32>
    %62 = tpu.transpose %61, [1, 0] : vector<32x2xf32> -> vector<2x32xf32>
    %c0_39 = arith.constant 0 : index
    %c0_40 = arith.constant 0 : index
    %c0_41 = arith.constant 0 : index
    %63 = vector.load %arg12[%c0_39, %c0_40, %c0_41] : memref<1x2x32xf32, #tpu.memory_space<vmem>>, vector<1x2x32xf32>
    %64 = vector.shape_cast %63 : vector<1x2x32xf32> to vector<2x32xf32>
    %65 = vector.shape_cast %62 : vector<2x32xf32> to vector<1x2x32xf32>
    tpu.vector_store %arg12[%c0_39, %c0_40, %c0_41], %65 {strides = array<i32>} : memref<1x2x32xf32, #tpu.memory_space<vmem>>, vector<1x2x32xf32>,
    return
  }
  func.func @transform_0(%arg0: i32) -> (i32, i32, i32) {
    %c0_i32 = arith.constant 0 : i32
    %c0_i32_0 = arith.constant 0 : i32
    %c0_i32_1 = arith.constant 0 : i32
    return %arg0, %c0_i32, %c0_i32_0 : i32, i32, i32
  }
  func.func @transform_1(%arg0: i32) -> (i32, i32) {
    %c0_i32 = arith.constant 0 : i32
    %c0_i32_0 = arith.constant 0 : i32
    %c0_i32_1 = arith.constant 0 : i32
    return %c0_i32, %c0_i32_0 : i32, i32
  }
  func.func @transform_2(%arg0: i32) -> (i32, i32) {
    %c0_i32 = arith.constant 0 : i32
    %c0_i32_0 = arith.constant 0 : i32
    %c0_i32_1 = arith.constant 0 : i32
    return %c0_i32, %c0_i32_0 : i32, i32
  }
  func.func @transform_3(%arg0: i32) -> (i32, i32) {
    %c0_i32 = arith.constant 0 : i32
    %c0_i32_0 = arith.constant 0 : i32
    %c0_i32_1 = arith.constant 0 : i32
    return %c0_i32, %c0_i32_0 : i32, i32
  }
  func.func @transform_4(%arg0: i32) -> (i32, i32) {
    %c0_i32 = arith.constant 0 : i32
    %c0_i32_0 = arith.constant 0 : i32
    %c0_i32_1 = arith.constant 0 : i32
    return %c0_i32, %c0_i32_0 : i32, i32
  }
  func.func @transform_5(%arg0: i32) -> (i32, i32) {
    %c0_i32 = arith.constant 0 : i32
    %c0_i32_0 = arith.constant 0 : i32
    %c0_i32_1 = arith.constant 0 : i32
    return %c0_i32, %c0_i32_0 : i32, i32
  }
  func.func @transform_6(%arg0: i32) -> (i32, i32) {
    %c0_i32 = arith.constant 0 : i32
    %c0_i32_0 = arith.constant 0 : i32
    %c0_i32_1 = arith.constant 0 : i32
    return %c0_i32, %c0_i32_0 : i32, i32
  }
  func.func @transform_7(%arg0: i32) -> (i32, i32) {
    %c0_i32 = arith.constant 0 : i32
    %c0_i32_0 = arith.constant 0 : i32
    %c0_i32_1 = arith.constant 0 : i32
    return %c0_i32, %c0_i32_0 : i32, i32
  }
  func.func @transform_8(%arg0: i32) -> (i32, i32) {
    %c0_i32 = arith.constant 0 : i32
    %c0_i32_0 = arith.constant 0 : i32
    %c0_i32_1 = arith.constant 0 : i32
    return %c0_i32, %c0_i32_0 : i32, i32
  }
  func.func @transform_9(%arg0: i32) -> (i32, i32) {
    %c0_i32 = arith.constant 0 : i32
    %c0_i32_0 = arith.constant 0 : i32
    %c0_i32_1 = arith.constant 0 : i32
    return %c0_i32, %c0_i32_0 : i32, i32
  }
  func.func @transform_10(%arg0: i32) -> (i32, i32) {
    %c0_i32 = arith.constant 0 : i32
    %c0_i32_0 = arith.constant 0 : i32
    %c0_i32_1 = arith.constant 0 : i32
    return %c0_i32, %c0_i32_0 : i32, i32
  }
  func.func @transform_11(%arg0: i32) -> (i32, i32, i32) {
    %c0_i32 = arith.constant 0 : i32
    %c0_i32_0 = arith.constant 0 : i32
    %c0_i32_1 = arith.constant 0 : i32
    return %arg0, %c0_i32, %c0_i32_0 : i32, i32, i32
  }
}

</mosaic_0001>

<llo_original>
// kernel: tpu_custom_call.1
$region0: #{tpu_custom_call.1}
  #allocation0 [shape = 'u32[]', space=smem, size = 0x4, offset = 0x4, fixed_abs, tag = 'smem constant byte address 0x4 - core index']
  #allocation1 [shape = 'u32[72,128]{1,0:T(1,128)}', space=vmem, size = 0x9000, scoped, tag = 'internal scratch']
  %s0 = inlined_call_operand.vmem [shape: f32[1,16,64], index: 0, kind: input, shape index: {}]
  %s1 = inlined_call_operand.vmem [shape: f32[64,2], index: 1, kind: input, shape index: {}]
  %s2 = inlined_call_operand.vmem [shape: f32[2,64], index: 2, kind: input, shape index: {}]
  %s3 = inlined_call_operand.vmem [shape: f32[32,16], index: 3, kind: input, shape index: {}]
  %s4 = inlined_call_operand.vmem [shape: f32[32,16], index: 4, kind: input, shape index: {}]
  %s5 = inlined_call_operand.vmem [shape: f32[32,16], index: 5, kind: input, shape index: {}]
  %s6 = inlined_call_operand.vmem [shape: f32[32,1], index: 6, kind: input, shape index: {}]
  %s7 = inlined_call_operand.vmem [shape: f32[32,32], index: 7, kind: input, shape index: {}]
  %s8 = inlined_call_operand.vmem [shape: f32[32,1], index: 8, kind: input, shape index: {}]
  %s9 = inlined_call_operand.vmem [shape: f32[16,32], index: 9, kind: input, shape index: {}]
  %s10 = inlined_call_operand.vmem [shape: f32[16,1], index: 10, kind: input, shape index: {}]
  %s11 = inlined_call_operand.hbm [shape: f32[1,2,32], index: 11, kind: output, shape index: {}]
  %s12 = sld [smem:[#allocation0]]
  $region54: #{tpu_custom_call.1} parent=0
    _
  %s14 = ssub.s32 1, %s12
  %s15 = scalar_select 0, %s14, %s12
  $region1: #{tpu_custom_call.1} parent=0
    #allocation2 [shape = 'u8[1024]{0}', space=vmem, size = 0x400, scoped, tag = 'output window, operand 0, single buffered']
    #allocation3 [shape = 's32[1]{0}', space=sflag, size = 0x4, scoped, tag = 'scoped memory for tpu_custom_call.1']
    %16 = vsyncpa [#allocation3], 0
    // Predicated region
    $region2: #{tpu_custom_call.1} parent=1 // pred_check
      _
    $region3: #{tpu_custom_call.1} parent=1 // pred_check_branch
      %18 = sbr.rel (0) target = $region5
    $region4: #{tpu_custom_call.1} parent=1 // pred_region
      _
    $region5: #{tpu_custom_call.1} parent=1 // pred_fallthru
      _
    // Predicated region
    $region6: #{tpu_custom_call.1} parent=1 // pred_check
      _
    $region7: #{tpu_custom_call.1} parent=1 // pred_check_branch
      %20 = sbr.rel (0) target = $region9
    $region8: #{tpu_custom_call.1} parent=1 // pred_region
      _
    $region9: #{tpu_custom_call.1} parent=1 // pred_fallthru
      _
    // Predicated region
    $region10: #{tpu_custom_call.1} parent=1 // pred_check
      _
    $region11: #{tpu_custom_call.1} parent=1 // pred_check_branch
      %22 = sbr.rel (0) target = $region13
    $region12: #{tpu_custom_call.1} parent=1 // pred_region
      _
    $region13: #{tpu_custom_call.1} parent=1 // pred_fallthru
      _
    // Predicated region
    $region14: #{tpu_custom_call.1} parent=1 // pred_check
      _
    $region15: #{tpu_custom_call.1} parent=1 // pred_check_branch
      %24 = sbr.rel (0) target = $region17
    $region16: #{tpu_custom_call.1} parent=1 // pred_region
      _
    $region17: #{tpu_custom_call.1} parent=1 // pred_fallthru
      _
    // Predicated region
    $region18: #{tpu_custom_call.1} parent=1 // pred_check
      _
    $region19: #{tpu_custom_call.1} parent=1 // pred_check_branch
      %26 = sbr.rel (0) target = $region21
    $region20: #{tpu_custom_call.1} parent=1 // pred_region
      _
    $region21: #{tpu_custom_call.1} parent=1 // pred_fallthru
      _
    // Predicated region
    $region22: #{tpu_custom_call.1} parent=1 // pred_check
      _
    $region23: #{tpu_custom_call.1} parent=1 // pred_check_branch
      %28 = sbr.rel (0) target = $region25
    $region24: #{tpu_custom_call.1} parent=1 // pred_region
      _
    $region25: #{tpu_custom_call.1} parent=1 // pred_fallthru
      _
    // Predicated region
    $region26: #{tpu_custom_call.1} parent=1 // pred_check
      _
    $region27: #{tpu_custom_call.1} parent=1 // pred_check_branch
      %30 = sbr.rel (0) target = $region29
    $region28: #{tpu_custom_call.1} parent=1 // pred_region
      _
    $region29: #{tpu_custom_call.1} parent=1 // pred_fallthru
      _
    // Predicated region
    $region30: #{tpu_custom_call.1} parent=1 // pred_check
      _
    $region31: #{tpu_custom_call.1} parent=1 // pred_check_branch
      %32 = sbr.rel (0) target = $region33
    $region32: #{tpu_custom_call.1} parent=1 // pred_region
      _
    $region33: #{tpu_custom_call.1} parent=1 // pred_fallthru
      _
    // Predicated region
    $region34: #{tpu_custom_call.1} parent=1 // pred_check
      _
    $region35: #{tpu_custom_call.1} parent=1 // pred_check_branch
      %34 = sbr.rel (0) target = $region37
    $region36: #{tpu_custom_call.1} parent=1 // pred_region
      _
    $region37: #{tpu_custom_call.1} parent=1 // pred_fallthru
      _
    // Predicated region
    $region38: #{tpu_custom_call.1} parent=1 // pred_check
      _
    $region39: #{tpu_custom_call.1} parent=1 // pred_check_branch
      %36 = sbr.rel (0) target = $region41
    $region40: #{tpu_custom_call.1} parent=1 // pred_region
      _
    $region41: #{tpu_custom_call.1} parent=1 // pred_fallthru
      _
    // Predicated region
    $region42: #{tpu_custom_call.1} parent=1 // pred_check
      _
    $region43: #{tpu_custom_call.1} parent=1 // pred_check_branch
      %38 = sbr.rel (0) target = $region45
    $region44: #{tpu_custom_call.1} parent=1 // pred_region
      _
    $region45: #{tpu_custom_call.1} parent=1 // pred_fallthru
      _
    %v39 = vld [vmem:[%s0] sm:$0xff]
    %v40 = vld [vmem:[%s0 + $0x8] sm:$0xff]
    %v41 = vld [vmem:[%s1] sm:$0xff]
    %v42 = vld [vmem:[%s1 + $0x8] sm:$0xff]
    %v43 = vld [vmem:[%s1 + $0x10] sm:$0xff]
    %v44 = vld [vmem:[%s1 + $0x18] sm:$0xff]
    %v45 = vld [vmem:[%s1 + $0x20] sm:$0xff]
    %v46 = vld [vmem:[%s1 + $0x28] sm:$0xff]
    %v47 = vld [vmem:[%s1 + $0x30] sm:$0xff]
    %v48 = vld [vmem:[%s1 + $0x38] sm:$0xff]
    %v49 = vld [vmem:[%s2] sm:$0x3]
    %v50 = vmul.f32 %v39, %v39
    %v51 = vmul.f32 %v40, %v40
    %vm52 = vcmask 523264
    %v54 = vsel %vm52, %v39, 0
    %v57 = vsel %vm52, %v40, 0
    %59 = vmatpush.msra.mxu0 0.0
    %60 = vmatpush.msra.mxu0 0.0
    %61 = vmatpush.msra.mxu0 0.0
    %62 = vmatpush.msra.mxu0 0.0
    %63 = vmatpush.msra.mxu0 0.0
    %64 = vmatpush.msra.mxu0 0.0
    %65 = vmatpush.msra.mxu0 0.0
    %66 = vmatpush.msra.mxu0 0.0
    %67 = vmatpush.msra.mxu0 %v48
    %68 = vmatpush.msra.mxu0 %v47
    %69 = vmatpush.msra.mxu0 %v46
    %70 = vmatpush.msra.mxu0 %v45
    %71 = vmatpush.msra.mxu0 %v44
    %72 = vmatpush.msra.mxu0 %v43
    %73 = vmatpush.msra.mxu0 %v42
    %74 = vmatpush.msra.mxu0 %v41
    %75 = vmatmul.f32.gmra.mxu0 %v54
    %v76 = vpop.f32.mrf.mxu0
    %v77 = vadd.f32 0.0, %v76
    %78 = vmatmul.f32.gmra.mxu0 %v57
    %v79 = vpop.f32.mrf.mxu0
    %v80 = vadd.f32 0.0, %v79
    %81 = vdwg.mxu0
    %v83 = vsel %vm52, %v50, 0
    %v86 = vsel %vm52, %v51, 0
    %88 = vmatpush.msra.mxu0 0.0
    %89 = vmatpush.msra.mxu0 0.0
    %90 = vmatpush.msra.mxu0 0.0
    %91 = vmatpush.msra.mxu0 0.0
    %92 = vmatpush.msra.mxu0 0.0
    %93 = vmatpush.msra.mxu0 0.0
    %94 = vmatpush.msra.mxu0 0.0
    %95 = vmatpush.msra.mxu0 0.0
    %96 = vmatpush.msra.mxu0 %v48
    %97 = vmatpush.msra.mxu0 %v47
    %98 = vmatpush.msra.mxu0 %v46
    %99 = vmatpush.msra.mxu0 %v45
    %100 = vmatpush.msra.mxu0 %v44
    %101 = vmatpush.msra.mxu0 %v43
    %102 = vmatpush.msra.mxu0 %v42
    %103 = vmatpush.msra.mxu0 %v41
    %104 = vmatmul.f32.gmra.mxu0 %v83
    %v105 = vpop.f32.mrf.mxu0
    %v106 = vadd.f32 0.0, %v105
    %107 = vmatmul.f32.gmra.mxu0 %v86
    %v108 = vpop.f32.mrf.mxu0
    %v109 = vadd.f32 0.0, %v108
    %110 = vdwg.mxu0
    %v111 = vmul.f32 %v77, 0.03125
    %v112 = vmul.f32 %v80, 0.03125
    %v113 = vmul.f32 %v77, %v111
    %v114 = vmul.f32 %v80, %v112
    %v115 = vsub.f32 %v106, %v113
    %v116 = vsub.f32 %v109, %v114
    %v117 = vmul.f32 %v115, 0.032258064
    %v118 = vmul.f32 %v116, 0.032258064
    %v119 = vmax.f32 %v117, 0.0
    %v120 = vmax.f32 %v118, 0.0
    %v121 = vrsqrt.pop %v119
    %v122 = vmul.f32 %v121, %v119
    %v123 = vmul.f32 %v122, %v121
    %v124 = vmul.f32 0.5, %v123
    %v125 = vsub.f32 1.5, %v124
    %v126 = vmul.f32 %v121, %v125
    %v127 = vmul.f32 %v119, %v126
    %vm128 = vcmp.eq.f32.partialorder %v119, inf
    %v129 = vsel %vm128, %v119, %v127
    %vm130 = vcmp.eq.f32.partialorder %v119, 0.0
    %v131 = vand.u32 %v119, 2147483648
    %v132 = vsel %vm130, %v131, %v129
    %v133 = vrsqrt.pop %v120
    %v134 = vmul.f32 %v133, %v120
    %v135 = vmul.f32 %v134, %v133
    %v136 = vmul.f32 0.5, %v135
    %v137 = vsub.f32 1.5, %v136
    %v138 = vmul.f32 %v133, %v137
    %v139 = vmul.f32 %v120, %v138
    %vm140 = vcmp.eq.f32.partialorder %v120, inf
    %v141 = vsel %vm140, %v120, %v139
    %vm142 = vcmp.eq.f32.partialorder %v120, 0.0
    %v143 = vand.u32 %v120, 2147483648
    %v144 = vsel %vm142, %v143, %v141
    %v145 = vmax.f32 %v132, 1e-05
    %v146 = vmax.f32 %v144, 1e-05
    %v147 = vld [vmem:[%s4] sm:$0xff]
    %v148 = vld [vmem:[%s4 + $0x8] sm:$0xff]
    %v149 = vld [vmem:[%s4 + $0x10] sm:$0xff]
    %v150 = vld [vmem:[%s4 + $0x18] sm:$0xff]
    %v151 = vld [vmem:[%s5] sm:$0xff]
    %v152 = vld [vmem:[%s5 + $0x8] sm:$0xff]
    %v153 = vld [vmem:[%s5 + $0x10] sm:$0xff]
    %v154 = vld [vmem:[%s5 + $0x18] sm:$0xff]
    %vm155 = vcmask 130048
    %v157 = vsel %vm155, %v151, 0
    %v160 = vsel %vm155, %v152, 0
    %v163 = vsel %vm155, %v153, 0
    %v166 = vsel %vm155, %v154, 0
    %168 = vmatpush.msra.mxu0 0.0
    %169 = vmatpush.msra.mxu0 0.0
    %170 = vmatpush.msra.mxu0 0.0
    %171 = vmatpush.msra.mxu0 0.0
    %172 = vmatpush.msra.mxu0 0.0
    %173 = vmatpush.msra.mxu0 0.0
    %174 = vmatpush.msra.mxu0 0.0
    %175 = vmatpush.msra.mxu0 0.0
    %176 = vmatpush.msra.mxu0 0.0
    %177 = vmatpush.msra.mxu0 0.0
    %178 = vmatpush.msra.mxu0 0.0
    %179 = vmatpush.msra.mxu0 0.0
    %180 = vmatpush.msra.mxu0 0.0
    %181 = vmatpush.msra.mxu0 0.0
    %182 = vmatpush.msra.mxu0 %v146
    %183 = vmatpush.msra.mxu0 %v145
    %184 = vmatmul.f32.gmra.mxu0 %v157
    %v185 = vpop.f32.mrf.mxu0
    %v186 = vadd.f32 0.0, %v185
    %187 = vmatmul.f32.gmra.mxu0 %v160
    %v188 = vpop.f32.mrf.mxu0
    %v189 = vadd.f32 0.0, %v188
    %190 = vmatmul.f32.gmra.mxu0 %v163
    %v191 = vpop.f32.mrf.mxu0
    %v192 = vadd.f32 0.0, %v191
    %193 = vmatmul.f32.gmra.mxu0 %v166
    %v194 = vpop.f32.mrf.mxu0
    %v195 = vadd.f32 0.0, %v194
    %196 = vdwg.mxu0
    %v198 = vsel %vm155, %v147, 0
    %v201 = vsel %vm155, %v148, 0
    %v204 = vsel %vm155, %v149, 0
    %v207 = vsel %vm155, %v150, 0
    %209 = vmatpush.msra.mxu0 0.0
    %210 = vmatpush.msra.mxu0 0.0
    %211 = vmatpush.msra.mxu0 0.0
    %212 = vmatpush.msra.mxu0 0.0
    %213 = vmatpush.msra.mxu0 0.0
    %214 = vmatpush.msra.mxu0 0.0
    %215 = vmatpush.msra.mxu0 0.0
    %216 = vmatpush.msra.mxu0 0.0
    %217 = vmatpush.msra.mxu0 0.0
    %218 = vmatpush.msra.mxu0 0.0
    %219 = vmatpush.msra.mxu0 0.0
    %220 = vmatpush.msra.mxu0 0.0
    %221 = vmatpush.msra.mxu0 0.0
    %222 = vmatpush.msra.mxu0 0.0
    %223 = vmatpush.msra.mxu0 %v112
    %224 = vmatpush.msra.mxu0 %v111
    %225 = vmatmul.f32.gmra.mxu0 %v198
    %v226 = vpop.f32.mrf.mxu0
    %v227 = vadd.f32 %v186, %v226
    %228 = vmatmul.f32.gmra.mxu0 %v201
    %v229 = vpop.f32.mrf.mxu0
    %v230 = vadd.f32 %v189, %v229
    %231 = vmatmul.f32.gmra.mxu0 %v204
    %v232 = vpop.f32.mrf.mxu0
    %v233 = vadd.f32 %v192, %v232
    %234 = vmatmul.f32.gmra.mxu0 %v207
    %v235 = vpop.f32.mrf.mxu0
    %v236 = vadd.f32 %v195, %v235
    %237 = vdwg.mxu0
    %v238 = vld [vmem:[%s6] sm:$0xff]
    %v239 = vld [vmem:[%s6 + $0x8] sm:$0xff]
    %v240 = vld [vmem:[%s6 + $0x10] sm:$0xff]
    %v241 = vld [vmem:[%s6 + $0x18] sm:$0xff]
    %243 = vset.pattern.permute.xlu0 0
    %244 = vperm.xlu0 %243, %v238
    %v245 = vpop.permute.xlu0 %244
    %248 = vset.pattern.permute.xlu0 0
    %249 = vperm.xlu0 %248, %v239
    %v250 = vpop.permute.xlu0 %249
    %253 = vset.pattern.permute.xlu0 0
    %254 = vperm.xlu0 %253, %v240
    %v255 = vpop.permute.xlu0 %254
    %258 = vset.pattern.permute.xlu0 0
    %259 = vperm.xlu0 %258, %v241
    %v260 = vpop.permute.xlu0 %259
    %v262 = vadd.f32 %v227, %v245
    %v263 = vadd.f32 %v230, %v250
    %v264 = vadd.f32 %v233, %v255
    %v265 = vadd.f32 %v236, %v260
    %v266 = vld [vmem:[%s3] sm:$0xff]
    %v267 = vld [vmem:[%s3 + $0x8] sm:$0xff]
    %v268 = vld [vmem:[%s3 + $0x10] sm:$0xff]
    %v269 = vld [vmem:[%s3 + $0x18] sm:$0xff]
    %vm270 = vcmask 15360
    %v272 = vsel %vm270, %v262, 0
    %v275 = vsel %vm270, %v263, 0
    %v278 = vsel %vm270, %v264, 0
    %v281 = vsel %vm270, %v265, 0
    %vm283 = vcmask 1041408
    %v285 = vsel %vm283, %v49, 0
    %287 = vmatpush.msra.mxu0 0.0
    %288 = vmatpush.msra.mxu0 0.0
    %289 = vmatpush.msra.mxu0 0.0
    %290 = vmatpush.msra.mxu0 0.0
    %291 = vmatpush.msra.mxu0 0.0
    %292 = vmatpush.msra.mxu0 0.0
    %293 = vmatpush.msra.mxu0 0.0
    %294 = vmatpush.msra.mxu0 0.0
    %295 = vmatpush.msra.mxu0 0.0
    %296 = vmatpush.msra.mxu0 0.0
    %297 = vmatpush.msra.mxu0 0.0
    %298 = vmatpush.msra.mxu0 0.0
    %299 = vmatpush.msra.mxu0 0.0
    %300 = vmatpush.msra.mxu0 0.0
    %301 = vmatpush.msra.mxu0 0.0
    %302 = vmatpush.msra.mxu0 %v285
    %303 = vmatmul.f32.gmra.mxu0 %v272
    %v304 = vpop.f32.mrf.mxu0
    %v305 = vadd.f32 0.0, %v304
    %306 = vmatmul.f32.gmra.mxu0 %v275
    %v307 = vpop.f32.mrf.mxu0
    %v308 = vadd.f32 0.0, %v307
    %309 = vmatmul.f32.gmra.mxu0 %v278
    %v310 = vpop.f32.mrf.mxu0
    %v311 = vadd.f32 0.0, %v310
    %312 = vmatmul.f32.gmra.mxu0 %v281
    %v313 = vpop.f32.mrf.mxu0
    %v314 = vadd.f32 0.0, %v313
    %315 = vdwg.mxu0
    %v317 = vsel %vm155, %v266, 0
    %v320 = vsel %vm155, %v267, 0
    %v323 = vsel %vm155, %v268, 0
    %v326 = vsel %vm155, %v269, 0
    %328 = vmatpush.msra.mxu0 0.0
    %329 = vmatpush.msra.mxu0 0.0
    %330 = vmatpush.msra.mxu0 0.0
    %331 = vmatpush.msra.mxu0 0.0
    %332 = vmatpush.msra.mxu0 0.0
    %333 = vmatpush.msra.mxu0 0.0
    %334 = vmatpush.msra.mxu0 0.0
    %335 = vmatpush.msra.mxu0 0.0
    %336 = vmatpush.msra.mxu0 0.0
    %337 = vmatpush.msra.mxu0 0.0
    %338 = vmatpush.msra.mxu0 0.0
    %339 = vmatpush.msra.mxu0 0.0
    %340 = vmatpush.msra.mxu0 0.0
    %341 = vmatpush.msra.mxu0 0.0
    %342 = vmatpush.msra.mxu0 %v40
    %343 = vmatpush.msra.mxu0 %v39
    %344 = vmatmul.f32.gmra.mxu0 %v317
    %v345 = vpop.f32.mrf.mxu0
    %v346 = vadd.f32 %v305, %v345
    %347 = vmatmul.f32.gmra.mxu0 %v320
    %v348 = vpop.f32.mrf.mxu0
    %v349 = vadd.f32 %v308, %v348
    %350 = vmatmul.f32.gmra.mxu0 %v323
    %v351 = vpop.f32.mrf.mxu0
    %v352 = vadd.f32 %v311, %v351
    %353 = vmatmul.f32.gmra.mxu0 %v326
    %v354 = vpop.f32.mrf.mxu0
    %v355 = vadd.f32 %v314, %v354
    %356 = vdwg.mxu0
    %v357 = vmax.f32 %v346, 0.0
    %v358 = vmax.f32 %v349, 0.0
    %v359 = vmax.f32 %v352, 0.0
    %v360 = vmax.f32 %v355, 0.0
    %v361 = vld [vmem:[%s7] sm:$0xff]
    %v362 = vld [vmem:[%s7 + $0x8] sm:$0xff]
    %v363 = vld [vmem:[%s7 + $0x10] sm:$0xff]
    %v364 = vld [vmem:[%s7 + $0x18] sm:$0xff]
    %v365 = vld [vmem:[%s8] sm:$0xff]
    %v366 = vld [vmem:[%s8 + $0x8] sm:$0xff]
    %v367 = vld [vmem:[%s8 + $0x10] sm:$0xff]
    %v368 = vld [vmem:[%s8 + $0x18] sm:$0xff]
    %370 = vset.pattern.permute.xlu0 0
    %371 = vperm.xlu0 %370, %v365
    %v372 = vpop.permute.xlu0 %371
    %375 = vset.pattern.permute.xlu0 0
    %376 = vperm.xlu0 %375, %v366
    %v377 = vpop.permute.xlu0 %376
    %380 = vset.pattern.permute.xlu0 0
    %381 = vperm.xlu0 %380, %v367
    %v382 = vpop.permute.xlu0 %381
    %385 = vset.pattern.permute.xlu0 0
    %386 = vperm.xlu0 %385, %v368
    %v387 = vpop.permute.xlu0 %386
    %vm389 = vcmask 261120
    %v391 = vsel %vm389, %v361, 0
    %v394 = vsel %vm389, %v362, 0
    %v397 = vsel %vm389, %v363, 0
    %v400 = vsel %vm389, %v364, 0
    %402 = vmatpush.msra.mxu0 0.0
    %403 = vmatpush.msra.mxu0 0.0
    %404 = vmatpush.msra.mxu0 0.0
    %405 = vmatpush.msra.mxu0 0.0
    %406 = vmatpush.msra.mxu0 0.0
    %407 = vmatpush.msra.mxu0 0.0
    %408 = vmatpush.msra.mxu0 0.0
    %409 = vmatpush.msra.mxu0 0.0
    %410 = vmatpush.msra.mxu0 0.0
    %411 = vmatpush.msra.mxu0 0.0
    %412 = vmatpush.msra.mxu0 0.0
    %413 = vmatpush.msra.mxu0 0.0
    %414 = vmatpush.msra.mxu0 %v360
    %415 = vmatpush.msra.mxu0 %v359
    %416 = vmatpush.msra.mxu0 %v358
    %417 = vmatpush.msra.mxu0 %v357
    %418 = vmatmul.f32.gmra.mxu0 %v391
    %v419 = vpop.f32.mrf.mxu0
    %v420 = vadd.f32 %v372, %v419
    %421 = vmatmul.f32.gmra.mxu0 %v394
    %v422 = vpop.f32.mrf.mxu0
    %v423 = vadd.f32 %v377, %v422
    %424 = vmatmul.f32.gmra.mxu0 %v397
    %v425 = vpop.f32.mrf.mxu0
    %v426 = vadd.f32 %v382, %v425
    %427 = vmatmul.f32.gmra.mxu0 %v400
    %v428 = vpop.f32.mrf.mxu0
    %v429 = vadd.f32 %v387, %v428
    %430 = vdwg.mxu0
    %v431 = vtanh.pop %v420
    %v432 = vtanh.pop %v423
    %v433 = vtanh.pop %v426
    %v434 = vtanh.pop %v429
    %v435 = vld [vmem:[%s9] sm:$0xff]
    %v436 = vld [vmem:[%s9 + $0x8] sm:$0xff]
    %v437 = vld [vmem:[%s10] sm:$0xff]
    %v438 = vld [vmem:[%s10 + $0x8] sm:$0xff]
    %440 = vset.pattern.permute.xlu0 0
    %441 = vperm.xlu0 %440, %v437
    %v442 = vpop.permute.xlu0 %441
    %445 = vset.pattern.permute.xlu0 0
    %446 = vperm.xlu0 %445, %v438
    %v447 = vpop.permute.xlu0 %446
    %v450 = vsel %vm389, %v435, 0
    %v453 = vsel %vm389, %v436, 0
    %455 = vmatpush.msra.mxu0 0.0
    %456 = vmatpush.msra.mxu0 0.0
    %457 = vmatpush.msra.mxu0 0.0
    %458 = vmatpush.msra.mxu0 0.0
    %459 = vmatpush.msra.mxu0 0.0
    %460 = vmatpush.msra.mxu0 0.0
    %461 = vmatpush.msra.mxu0 0.0
    %462 = vmatpush.msra.mxu0 0.0
    %463 = vmatpush.msra.mxu0 0.0
    %464 = vmatpush.msra.mxu0 0.0
    %465 = vmatpush.msra.mxu0 0.0
    %466 = vmatpush.msra.mxu0 0.0
    %467 = vmatpush.msra.mxu0 %v434
    %468 = vmatpush.msra.mxu0 %v433
    %469 = vmatpush.msra.mxu0 %v432
    %470 = vmatpush.msra.mxu0 %v431
    %471 = vmatmul.f32.gmra.mxu0 %v450
    %v472 = vpop.f32.mrf.mxu0
    %v473 = vadd.f32 %v442, %v472
    %474 = vmatmul.f32.gmra.mxu0 %v453
    %v475 = vpop.f32.mrf.mxu0
    %v476 = vadd.f32 %v447, %v475
    %477 = vdwg.mxu0
    %v478 = vsel %vm52, %v473, -inf
    %479 = vmax.xlane.f32.xlu0 %v478
    %v480 = vpop.xlane.xlu0 %479
    %v481 = vsel %vm52, %v476, -inf
    %482 = vmax.xlane.f32.xlu0 %v481
    %v483 = vpop.xlane.xlu0 %482
    %v484 = vsub.f32 %v473, %v480
    %v485 = vsub.f32 %v476, %v483
    %v486 = vmul.f32 %v484, 1.442695
    %v487 = vpow.pop %v486
    %v488 = vmul.f32 %v485, 1.442695
    %v489 = vpow.pop %v488
    %v491 = vsel %vm52, %v487, 0
    %v494 = vsel %vm52, %v489, 0
    %496 = vmatpush.msra.mxu0 0.0
    %497 = vmatpush.msra.mxu0 0.0
    %498 = vmatpush.msra.mxu0 0.0
    %499 = vmatpush.msra.mxu0 0.0
    %500 = vmatpush.msra.mxu0 0.0
    %501 = vmatpush.msra.mxu0 0.0
    %502 = vmatpush.msra.mxu0 0.0
    %503 = vmatpush.msra.mxu0 0.0
    %504 = vmatpush.msra.mxu0 %v48
    %505 = vmatpush.msra.mxu0 %v47
    %506 = vmatpush.msra.mxu0 %v46
    %507 = vmatpush.msra.mxu0 %v45
    %508 = vmatpush.msra.mxu0 %v44
    %509 = vmatpush.msra.mxu0 %v43
    %510 = vmatpush.msra.mxu0 %v42
    %511 = vmatpush.msra.mxu0 %v41
    %512 = vmatmul.f32.gmra.mxu0 %v491
    %v513 = vpop.f32.mrf.mxu0
    %v514 = vadd.f32 0.0, %v513
    %515 = vmatmul.f32.gmra.mxu0 %v494
    %v516 = vpop.f32.mrf.mxu0
    %v517 = vadd.f32 0.0, %v516
    %518 = vdwg.mxu0
    %v519 = vmul.f32 %v39, %v487
    %v520 = vmul.f32 %v40, %v489
    %v522 = vsel %vm52, %v519, 0
    %v525 = vsel %vm52, %v520, 0
    %527 = vmatpush.msra.mxu0 0.0
    %528 = vmatpush.msra.mxu0 0.0
    %529 = vmatpush.msra.mxu0 0.0
    %530 = vmatpush.msra.mxu0 0.0
    %531 = vmatpush.msra.mxu0 0.0
    %532 = vmatpush.msra.mxu0 0.0
    %533 = vmatpush.msra.mxu0 0.0
    %534 = vmatpush.msra.mxu0 0.0
    %535 = vmatpush.msra.mxu0 %v48
    %536 = vmatpush.msra.mxu0 %v47
    %537 = vmatpush.msra.mxu0 %v46
    %538 = vmatpush.msra.mxu0 %v45
    %539 = vmatpush.msra.mxu0 %v44
    %540 = vmatpush.msra.mxu0 %v43
    %541 = vmatpush.msra.mxu0 %v42
    %542 = vmatpush.msra.mxu0 %v41
    %543 = vmatmul.f32.gmra.mxu0 %v522
    %v544 = vpop.f32.mrf.mxu0
    %v545 = vadd.f32 0.0, %v544
    %546 = vmatmul.f32.gmra.mxu0 %v525
    %v547 = vpop.f32.mrf.mxu0
    %v548 = vadd.f32 0.0, %v547
    %549 = vdwg.mxu0
    %v550 = vmul.f32 %v50, %v487
    %v551 = vmul.f32 %v51, %v489
    %v553 = vsel %vm52, %v550, 0
    %v556 = vsel %vm52, %v551, 0
    %558 = vmatpush.msra.mxu0 0.0
    %559 = vmatpush.msra.mxu0 0.0
    %560 = vmatpush.msra.mxu0 0.0
    %561 = vmatpush.msra.mxu0 0.0
    %562 = vmatpush.msra.mxu0 0.0
    %563 = vmatpush.msra.mxu0 0.0
    %564 = vmatpush.msra.mxu0 0.0
    %565 = vmatpush.msra.mxu0 0.0
    %566 = vmatpush.msra.mxu0 %v48
    %567 = vmatpush.msra.mxu0 %v47
    %568 = vmatpush.msra.mxu0 %v46
    %569 = vmatpush.msra.mxu0 %v45
    %570 = vmatpush.msra.mxu0 %v44
    %571 = vmatpush.msra.mxu0 %v43
    %572 = vmatpush.msra.mxu0 %v42
    %573 = vmatpush.msra.mxu0 %v41
    %574 = vmatmul.f32.gmra.mxu0 %v553
    %v575 = vpop.f32.mrf.mxu0
    %v576 = vadd.f32 0.0, %v575
    %577 = vmatmul.f32.gmra.mxu0 %v556
    %v578 = vpop.f32.mrf.mxu0
    %v579 = vadd.f32 0.0, %v578
    %580 = vdwg.mxu0
    %v581 = vrcp.pop %v514
    %v582 = vrcp.pop %v517
    %v583 = vmul.f32 %v545, %v581
    %v584 = vmul.f32 %v548, %v582
    %v585 = vmul.f32 %v576, %v581
    %v586 = vmul.f32 %v579, %v582
    %v587 = vmul.f32 %v583, %v583
    %v588 = vmul.f32 %v584, %v584
    %v589 = vsub.f32 %v585, %v587
    %v590 = vsub.f32 %v586, %v588
    %v591 = vmax.f32 %v589, 1e-05
    %v592 = vmax.f32 %v590, 1e-05
    %v593 = vrsqrt.pop %v591
    %v594 = vmul.f32 %v593, %v591
    %v595 = vmul.f32 %v594, %v593
    %v596 = vmul.f32 0.5, %v595
    %v597 = vsub.f32 1.5, %v596
    %v598 = vmul.f32 %v593, %v597
    %v599 = vmul.f32 %v591, %v598
    %vm600 = vcmp.eq.f32.partialorder %v591, inf
    %v601 = vsel %vm600, %v591, %v599
    %vm602 = vcmp.eq.f32.partialorder %v591, 0.0
    %v603 = vand.u32 %v591, 2147483648
    %v604 = vsel %vm602, %v603, %v601
    %v605 = vrsqrt.pop %v592
    %v606 = vmul.f32 %v605, %v592
    %v607 = vmul.f32 %v606, %v605
    %v608 = vmul.f32 0.5, %v607
    %v609 = vsub.f32 1.5, %v608
    %v610 = vmul.f32 %v605, %v609
    %v611 = vmul.f32 %v592, %v610
    %vm612 = vcmp.eq.f32.partialorder %v592, inf
    %v613 = vsel %vm612, %v592, %v611
    %vm614 = vcmp.eq.f32.partialorder %v592, 0.0
    %v615 = vand.u32 %v592, 2147483648
    %v616 = vsel %vm614, %v615, %v613
    %617 = vxpose.xlu0.b32.start [1/16] %v583, 128
    %618 = vxpose.xlu0.b32.cont [2/16] %v584, 128
    %619 = vxpose.xlu0.b32.cont [3/16] %v604, 128
    %620 = vxpose.xlu0.b32.cont [4/16] %v616, 128
    %621 = vxpose.xlu0.b32.cont [5/16] 0.0, 128
    %622 = vxpose.xlu0.b32.cont [6/16] 0.0, 128
    %623 = vxpose.xlu0.b32.cont [7/16] 0.0, 128
    %624 = vxpose.xlu0.b32.cont [8/16] 0.0, 128
    %625 = vxpose.xlu0.b32.cont [9/16] 0.0, 128
    %626 = vxpose.xlu0.b32.cont [10/16] 0.0, 128
    %627 = vxpose.xlu0.b32.cont [11/16] 0.0, 128
    %628 = vxpose.xlu0.b32.cont [12/16] 0.0, 128
    %629 = vxpose.xlu0.b32.cont [13/16] 0.0, 128
    %630 = vxpose.xlu0.b32.cont [14/16] 0.0, 128
    %631 = vxpose.xlu0.b32.cont [15/16] 0.0, 128
    %632 = vxpose.xlu0.b32.end [16/16] 0.0, 128
    %v633 = vpop.trf.xlu0
    %v634 = vpop.trf.xlu0
    %v635 = vpop.trf.xlu0
    %v636 = vpop.trf.xlu0
    %v637 = vpop.trf.xlu0
    %v638 = vpop.trf.xlu0
    %v639 = vpop.trf.xlu0
    %v640 = vpop.trf.xlu0
    %v641 = vpop.trf.xlu0
    %v642 = vpop.trf.xlu0
    %v643 = vpop.trf.xlu0
    %v644 = vpop.trf.xlu0
    %v645 = vpop.trf.xlu0
    %v646 = vpop.trf.xlu0
    %v647 = vpop.trf.xlu0
    %v648 = vpop.trf.xlu0
    %vm649 = vcmask 254976
    %650 = vst.msk [vmem:[#allocation2] sm:$0x3] %vm649, %v633
    // Predicated region
    $region46: #{tpu_custom_call.1} parent=1 // pred_check
      _
    $region47: #{tpu_custom_call.1} parent=1 // pred_check_branch
      %652 = sbr.rel (0) target = $region49
    $region48: #{tpu_custom_call.1} parent=1 // pred_region
      %654 = vsyncadd [#allocation3], 0
      %s656 = sshll.u32 [#allocation2], 4
      %s657 = int_to_ptr.vmem [resolvable:$true] %s656
      %s658 = sshll.u32 %s11, 4
      %s659 = int_to_ptr.hbm [resolvable:$true] %s658
      %661 = dma.vmem_to_hbm [thread:$0]  %s657, 32, %s659, [#allocation3]
    $region49: #{tpu_custom_call.1} parent=1 // pred_fallthru
      _
    // Predicated region
    $region50: #{tpu_custom_call.1} parent=1 // pred_check
      _
    $region51: #{tpu_custom_call.1} parent=1 // pred_check_branch
      %663 = sbr.rel (0) target = $region53
    $region52: #{tpu_custom_call.1} parent=1 // pred_region
      %665 = dma.done [#allocation3], 32
    $region53: #{tpu_custom_call.1} parent=1 // pred_fallthru
      _
    %666 = vsyncpa [#allocation3], 1

</llo_original>
